<compile_context>
chip_gen: v6e
topology: v6e:2x2x1
jax: 0.10.0
libtpu: 0.0.40
codegen_flags: <defaults>
</compile_context>

<pallas_src>
import functools

import jax
import jax.numpy as jnp
from jax.experimental import pallas as pl
from jax.experimental.pallas import tpu as pltpu


# ---------------------------------------------------------------------------
# Kernel
# ---------------------------------------------------------------------------
def _bayeswrap_kernel(x_ref, w_ref, b_ref, *rest, num_particles, num_classes,
                      dense_pack, with_entropy):
    """Grid = (batch tiles ['parallel'], D tiles ['arbitrary' K-reduction])."""
    acc_ref = rest[-1]
    out_refs = rest[:-1]
    k = pl.program_id(1)

    # Bias folded into the accumulator init (no (TB, LF) logits temp later).
    @pl.when(k == 0)
    def _():
        acc_ref[...] = jnp.broadcast_to(b_ref[...], acc_ref.shape)

    # One wide MXU pass per (i, k) step: (TB, TD) @ (TD, LF), f32 accumulate.
    acc_ref[...] += jnp.dot(x_ref[...], w_ref[...],
                            preferred_element_type=jnp.float32)

    @pl.when(k == pl.num_programs(1) - 1)
    def _():
        tb, lf = acc_ref.shape
        nc = num_classes
        inv_p = jnp.float32(1.0 / num_particles)

        if dense_pack:
            # All particles' real classes packed into one 128-lane chunk.
            # Per-particle softmax via in-lane segment masks; the tiny
            # cross-particle mean/std is finished in the wrapper.
            if with_entropy:
                lg_ref, s_ref, ent_ref = out_refs
            else:
                lg_ref, s_ref = out_refs
            acc = acc_ref[...]                                    # (TB, 128)
            lane = jax.lax.broadcasted_iota(jnp.int32, (tb, lf), 1)
            s_all = jnp.zeros((tb, lf), jnp.float32)
            ent_sum = jnp.zeros((tb, 1), jnp.float32)
            for p in range(num_particles):
                seg = (lane >= p * nc) & (lane < (p + 1) * nc)
                m = jnp.max(jnp.where(seg, acc, jnp.float32(-1e30)),
                            axis=-1, keepdims=True)
                ex = jnp.where(seg, jnp.exp(acc - m), jnp.float32(0.0))
                denom = jnp.sum(ex, axis=-1, keepdims=True)
                s = ex * pl.reciprocal(denom)
                s_all = s_all + s                                 # disjoint segments
                if with_entropy:
                    # LSE identity: H = log(Z) - sum_c s_c * (l_c - max)
                    ent_sum = ent_sum + (
                        jnp.log(denom)
                        - jnp.sum(s * (acc - m), axis=-1, keepdims=True))
            valid = lane < num_particles * nc
            lg_ref[...] = jnp.where(valid, acc, jnp.float32(0.0))  # packed logits
            s_ref[...] = s_all                                     # packed softmaxes
            if with_entropy:
                ent_ref[...] = jnp.broadcast_to(ent_sum * inv_p, (tb, lf))
        else:
            # Per-particle 128-padded chunks: slice the accumulator ref directly
            # (128-aligned static views), fuse mean / one-pass std / entropy.
            ncp = lf // num_particles
            if with_entropy:
                logits_ref, soft_ref, std_ref, ent_ref = out_refs
            else:
                logits_ref, soft_ref = out_refs
            lg_sum = jnp.zeros((tb, ncp), jnp.float32)
            s_sum = jnp.zeros((tb, ncp), jnp.float32)
            sq_sum = jnp.zeros((tb, ncp), jnp.float32)
            ent_sum = jnp.zeros((tb, 1), jnp.float32)
            for p in range(num_particles):
                lg = acc_ref[:, p * ncp:(p + 1) * ncp]            # (TB, NCP)
                m = jnp.max(lg, axis=-1, keepdims=True)
                ex = jnp.exp(lg - m)
                denom = jnp.sum(ex, axis=-1, keepdims=True)
                s = ex * pl.reciprocal(denom)
                lg_sum = lg_sum + lg
                s_sum = s_sum + s
                if with_entropy:
                    sq_sum = sq_sum + s * s
                    ent_sum = ent_sum + (
                        jnp.log(denom)
                        - jnp.sum(s * (lg - m), axis=-1, keepdims=True))
            logits_ref[...] = lg_sum * inv_p
            s_mean = s_sum * inv_p
            soft_ref[...] = s_mean
            if with_entropy:
                if num_particles > 1:
                    var = (sq_sum - num_particles * (s_mean * s_mean)) * \
                          jnp.float32(1.0 / (num_particles - 1))
                    std_ref[...] = jnp.sqrt(jnp.maximum(var, 0.0))
                else:
                    # torch.std(ddof=1) over one particle is NaN.
                    std_ref[...] = jnp.full((tb, ncp), jnp.nan, jnp.float32)
                ent_ref[...] = jnp.broadcast_to(ent_sum * inv_p, (tb, ncp))


# ---------------------------------------------------------------------------
# Tiling heuristics
# ---------------------------------------------------------------------------
def _vmem_budget_bytes():
    try:
        kind = jax.devices()[0].device_kind.lower()
    except Exception:  # pragma: no cover
        kind = ""
    # v4/v5e/v6e have 128 MiB physical VMEM; unknown / v7x treated as 64 MiB.
    if any(t in kind for t in ("v4", "v5 lite", "v5e", "v6 lite", "v6e", "trillium")):
        return 96 * (1 << 20)
    return 44 * (1 << 20)


def _largest_divisor(n, align, target):
    """Largest d <= target with d % align == 0 and n % d == 0; else n (full dim)."""
    target = min(target, n)
    d = target - (target % align)
    while d >= align:
        if n % d == 0:
            return d
        d -= align
    return n


def _select_tiles(B, D, LF, out_w, n_out, in_itemsize):
    budget = _vmem_budget_bytes()
    # D (K-reduction) tile: weights double-buffer aimed at ~45% of budget.
    td_target = max(128, int(0.45 * budget) // max(1, 2 * LF * in_itemsize))
    td_target = min(td_target, 2048, D)
    TD = _largest_divisor(D, 128, td_target)
    # Batch tile: x double buffer + f32 accumulator + double-buffered outputs.
    per_row = 2 * TD * in_itemsize + LF * 4 + 2 * n_out * out_w * 4
    tb_target = (budget - 2 * TD * LF * in_itemsize - 2 * LF * 4) // per_row
    tb_target = min(max(8, tb_target), 512, B)
    TB = _largest_divisor(B, 8, tb_target)
    # Prefer >=2 batch tiles so the 'parallel' axis can shard across v7x cores.
    if B // TB < 2 and B >= 16:
        alt = _largest_divisor(B, 8, B // 2)
        if alt >= 8 and B % alt == 0:
            TB = alt
    return TB, TD
    # TODO(synk): shapes where D has no 128-multiple divisor and is too large for a
    # single tile would need a masked last tile; not required for these sizes.


# ---------------------------------------------------------------------------
# Parameter packing (hoisted out of the jitted forward; call once per update)
# ---------------------------------------------------------------------------
def pack_particles(weights, biases, *, matmul_dtype=jnp.bfloat16, force_padded=False):
    """weights: (P, D, NC), biases: (P, NC) -> fused lane-dense (D, LF), (1, LF)."""
    P, D, NC = weights.shape
    w32 = weights.astype(jnp.float32)
    b32 = biases.astype(jnp.float32)
    dense = (P * NC <= 128) and not force_padded
    if dense:
        LF = 128
        w = (jnp.zeros((D, LF), jnp.float32)
             .at[:, :P * NC].set(jnp.transpose(w32, (1, 0, 2)).reshape(D, P * NC)))
        b = (jnp.full((1, LF), -1e30, jnp.float32)
             .at[0, :P * NC].set(b32.reshape(P * NC)))
    else:
        NCP = ((NC + 127) // 128) * 128
        LF = P * NCP
        w = (jnp.zeros((D, P, NCP), jnp.float32)
             .at[:, :, :NC].set(jnp.transpose(w32, (1, 0, 2)))
             .reshape(D, LF))
        b = (jnp.full((P, NCP), -1e30, jnp.float32)   # -1e30 -> softmax 0 on pad cols
             .at[:, :NC].set(b32)
             .reshape(1, LF))
    meta = dict(num_particles=P, num_classes=NC, dense_pack=dense)
    return (w.astype(matmul_dtype), b), meta


# ---------------------------------------------------------------------------
# Forward
# ---------------------------------------------------------------------------
@functools.partial(jax.jit, static_argnames=("num_particles", "num_classes",
                                             "dense_pack", "return_entropy"))
def bayeswrap_forward(x, w_fused, b_fused, *, num_particles, num_classes,
                      dense_pack, return_entropy=False):
    """x: (B, C, H, W).  w_fused: (D, LF) packed.  b_fused: (1, LF) f32."""
    B = x.shape[0]
    D, LF = w_fused.shape
    P, NC = num_particles, num_classes
    x_flat = x.reshape(B, -1).astype(w_fused.dtype)
    assert x_flat.shape[1] == D, (x_flat.shape, D)

    if dense_pack:
        out_w = LF                         # 128
        n_out = 3 if return_entropy else 2
    else:
        out_w = LF // P                    # NCP (128-padded classes)
        n_out = 4 if return_entropy else 2

    in_itemsize = jnp.dtype(w_fused.dtype).itemsize
    TB, TD = _select_tiles(B, D, LF, out_w, n_out, in_itemsize)
    grid = (B // TB, D // TD)

    # Explicit scoped-VMEM limit from the actual tile budget (+ headroom).
    needed = (2 * TB * TD * in_itemsize            # x, double buffered
              + 2 * TD * LF * in_itemsize          # fused weights, double buffered
              + 2 * 8 * LF * 4                     # bias (sublane-padded)
              + TB * LF * 4                        # f32 accumulator scratch
              + 2 * n_out * max(TB, 8) * out_w * 4)  # outputs, double buffered
    vmem_limit = int(min(needed + (8 << 20), 124 << 20))

    kernel = functools.partial(_bayeswrap_kernel, num_particles=P,
                               num_classes=NC, dense_pack=dense_pack,
                               with_entropy=return_entropy)

    out_shapes = tuple(jax.ShapeDtypeStruct((B, out_w), jnp.float32)
                       for _ in range(n_out))
    out_specs = [pl.BlockSpec((TB, out_w), lambda i, k: (i, 0))
                 for _ in range(n_out)]

    grid_spec = pltpu.PrefetchScalarGridSpec(
        num_scalar_prefetch=0,
        grid=grid,
        in_specs=[
            pl.BlockSpec((TB, TD), lambda i, k: (i, k)),   # x tile
            pl.BlockSpec((TD, LF), lambda i, k: (k, 0)),   # fused weights tile
            pl.BlockSpec((1, LF), lambda i, k: (0, 0)),    # fused bias (resident)
        ],
        out_specs=out_specs,
        scratch_shapes=[pltpu.VMEM((TB, LF), jnp.float32)],
    )

    outs = pl.pallas_call(
        kernel,
        out_shape=out_shapes,
        grid_spec=grid_spec,
        compiler_params=pltpu.CompilerParams(
            dimension_semantics=("parallel", "arbitrary"),
            vmem_limit_bytes=vmem_limit),
    )(x_flat, w_fused, b_fused)

    if dense_pack:
        if return_entropy:
            lgp, sp, ep = outs
        else:
            lgp, sp = outs
        lg = lgp[:, :P * NC].reshape(B, P, NC)     # per-particle logits
        sf = sp[:, :P * NC].reshape(B, P, NC)      # per-particle softmaxes
        logits = jnp.mean(lg, axis=1)
        soft = jnp.mean(sf, axis=1)
        if return_entropy:
            stds = jnp.std(sf, axis=1, ddof=1)
            return logits, ep[:, 0], soft, stds
        return logits, soft
    else:
        if return_entropy:
            lm, sm, ss, em = outs
            return lm[:, :NC], em[:, 0], sm[:, :NC], ss[:, :NC]
        lm, sm = outs
        return lm[:, :NC], sm[:, :NC]


# ---------------------------------------------------------------------------
# Pure-JAX reference mirroring PyTorch BayesWrap.forward
# ---------------------------------------------------------------------------
def _reference_forward(x, weights, biases, return_entropy=False):
    B = x.shape[0]
    P, D, NC = weights.shape
    xf = x.reshape(B, D).astype(jnp.float32)
    logits_all = jnp.einsum("bd,pdc->pbc", xf, weights.astype(jnp.float32),
                            precision=jax.lax.Precision.HIGHEST)
    logits_all = logits_all + biases.astype(jnp.float32)[:, None, :]
    soft_all = jax.nn.softmax(logits_all, axis=-1)
    ent_all = jnp.sum(-soft_all * jnp.log(soft_all + 1e-8), axis=-1)
    logits = jnp.mean(logits_all, axis=0)
    soft_mean = jnp.mean(soft_all, axis=0)
    soft_std = jnp.std(soft_all, axis=0, ddof=1)
    if return_entropy:
        return logits, jnp.mean(ent_all, axis=0), soft_mean, soft_std
    return logits, soft_mean


if __name__ == "__main__":
    # Small, module-consistent shapes: batch=2, channels=4, spatial=16x16,
    # num_particles=4 (int(config('opt'))), num_classes=10.
    B, C, H, W = 2, 4, 16, 16
    P, NC = 4, 10
    D = C * H * W

    key = jax.random.PRNGKey(0)
    kx, kw, kb = jax.random.split(key, 3)
    x = jax.random.normal(kx, (B, C, H, W), dtype=jnp.float32)
    weights = 0.02 * jax.random.normal(kw, (P, D, NC), dtype=jnp.float32)
    biases = 0.1 * jax.random.normal(kb, (P, NC), dtype=jnp.float32)

    q = lambda a: a.astype(jnp.bfloat16).astype(jnp.float32)
    ref_exact = _reference_forward(x, weights, biases, return_entropy=True)
    ref_quant = _reference_forward(q(x), q(weights), biases, return_entropy=True)

    def check(outs, refs, atol, rtol, tag):
        assert len(outs) == len(refs), (tag, len(outs), len(refs))
        for o, r in zip(outs, refs):
            assert o.shape == r.shape, (tag, o.shape, r.shape)
            err = float(jnp.max(jnp.abs(o.astype(jnp.float32) - r)))
            assert jnp.allclose(o, r, atol=atol, rtol=rtol), (tag, err)

    # Dense-packed layout (P*NC <= 128), bf16 matmul (default path).
    (wf, bf), meta = pack_particles(weights, biases)
    outs = jax.block_until_ready(
        bayeswrap_forward(x, wf, bf, return_entropy=True, **meta))
    check(outs, ref_quant, 1e-4, 1e-4, "dense/bf16 vs bf16-quantized reference")
    check(outs, ref_exact, 2e-2, 2e-2, "dense/bf16 vs exact reference")

    # return_entropy=False path: (logits, soft_out), no std/entropy streams.
    outs2 = jax.block_until_ready(
        bayeswrap_forward(x, wf, bf, return_entropy=False, **meta))
    check(outs2, (ref_quant[0], ref_quant[2]), 1e-4, 1e-4, "dense/bf16 no-entropy")

    # 128-padded per-particle layout (what large class counts use), bf16 matmul.
    (wfp, bfp), metap = pack_particles(weights, biases, force_padded=True)
    outsp = jax.block_until_ready(
        bayeswrap_forward(x, wfp, bfp, return_entropy=True, **metap))
    check(outsp, ref_quant, 1e-4, 1e-4, "padded/bf16 vs bf16-quantized reference")

    # Optional full-f32 matmul path (tighter numerics when needed).
    (wf32, bf32), meta32 = pack_particles(weights, biases, matmul_dtype=jnp.float32)
    outs32 = jax.block_until_ready(
        bayeswrap_forward(x, wf32, bf32, return_entropy=True, **meta32))
    check(outs32, ref_exact, 1e-2, 1e-2, "dense/f32 vs exact reference")

    # TODO(synk): sample_particle / get_particle / forward_q / update_grads (SVGD
    # gradient mixing) are host-side training utilities, not part of forward().

    print("KERNEL_OK")
</pallas_src>

<mosaic_0001>
module attributes {stable_mosaic.version = 11 : i64} {
  func.func @_bayeswrap_kernel(%arg0: i32, %arg1: i32, %arg2: memref<2x1024xbf16, #tpu.memory_space<vmem>>, %arg3: memref<1024x128xbf16, #tpu.memory_space<vmem>>, %arg4: memref<1x128xf32, #tpu.memory_space<vmem>>, %arg5: memref<2x128xf32, #tpu.memory_space<vmem>>, %arg6: memref<2x128xf32, #tpu.memory_space<vmem>>, %arg7: memref<2x128xf32, #tpu.memory_space<vmem>>, %arg8: memref<2x128xf32, #tpu.memory_space<vmem>>) attributes {dimension_semantics = [#tpu.dimension_semantics<parallel>, #tpu.dimension_semantics<arbitrary>], iteration_bounds = array<i64: 1, 1>, scalar_prefetch = 0 : i64, scratch_operands = 1 : i64, tpu.core_type = #tpu.core_type<tc>, window_params = [{transform_indices = @transform_0, window_bounds = array<i64: 2, 1024>}, {transform_indices = @transform_1, window_bounds = array<i64: 1024, 128>}, {pipeline_mode = #tpu.pipeline_mode<synchronous>, transform_indices = @transform_2, window_bounds = array<i64: 1, 128>}, {transform_indices = @transform_3, window_bounds = array<i64: 2, 128>}, {transform_indices = @transform_4, window_bounds = array<i64: 2, 128>}, {transform_indices = @transform_5, window_bounds = array<i64: 2, 128>}]} {
    %c0_i32 = arith.constant 0 : i32
    %0 = arith.cmpi eq, %arg1, %c0_i32 : i32
    %1 = arith.extui %0 : i1 to i32
    %c0_i32_0 = arith.constant 0 : i32
    %2 = arith.cmpi ne, %1, %c0_i32_0 : i32
    scf.if %2 {
      %c0_10 = arith.constant 0 : index
      %c0_11 = arith.constant 0 : index
      %12 = vector.load %arg4[%c0_10, %c0_11] : memref<1x128xf32, #tpu.memory_space<vmem>>, vector<1x128xf32>
      %13 = vector.shape_cast %12 : vector<1x128xf32> to vector<1x128xf32>
      %14 = vector.broadcast %13 : vector<1x128xf32> to vector<2x128xf32>
      %c0_12 = arith.constant 0 : index
      %c0_13 = arith.constant 0 : index
      %15 = vector.load %arg8[%c0_12, %c0_13] : memref<2x128xf32, #tpu.memory_space<vmem>>, vector<2x128xf32>
      tpu.vector_store %arg8[%c0_12, %c0_13], %14 {strides = array<i32>} : memref<2x128xf32, #tpu.memory_space<vmem>>, vector<2x128xf32>,
    } else {
    }
    %c0 = arith.constant 0 : index
    %c0_1 = arith.constant 0 : index
    %3 = vector.load %arg8[%c0, %c0_1] : memref<2x128xf32, #tpu.memory_space<vmem>>, vector<2x128xf32>
    %c0_2 = arith.constant 0 : index
    %c0_3 = arith.constant 0 : index
    %4 = vector.load %arg2[%c0_2, %c0_3] : memref<2x1024xbf16, #tpu.memory_space<vmem>>, vector<2x1024xbf16>
    %c0_4 = arith.constant 0 : index
    %c0_5 = arith.constant 0 : index
    %5 = vector.load %arg3[%c0_4, %c0_5] : memref<1024x128xbf16, #tpu.memory_space<vmem>>, vector<1024x128xbf16>
    %cst = arith.constant dense<0.000000e+00> : vector<2x128xf32>
    %6 = tpu.matmul %4, %5, %cst {dimension_numbers = #tpu.dot_dimension_numbers<[1], [0], [0], [1], [0, 0, 1, 1], [], []>} : vector<2x1024xbf16>, vector<1024x128xbf16>, vector<2x128xf32> -> vector<2x128xf32>
    %7 = arith.addf %3, %6 : vector<2x128xf32>
    %c0_6 = arith.constant 0 : index
    %c0_7 = arith.constant 0 : index
    %8 = vector.load %arg8[%c0_6, %c0_7] : memref<2x128xf32, #tpu.memory_space<vmem>>, vector<2x128xf32>
    tpu.vector_store %arg8[%c0_6, %c0_7], %7 {strides = array<i32>} : memref<2x128xf32, #tpu.memory_space<vmem>>, vector<2x128xf32>,
    %c0_i32_8 = arith.constant 0 : i32
    %9 = arith.cmpi eq, %arg1, %c0_i32_8 : i32
    %10 = arith.extui %9 : i1 to i32
    %c0_i32_9 = arith.constant 0 : i32
    %11 = arith.cmpi ne, %10, %c0_i32_9 : i32
    scf.if %11 {
      %c0_10 = arith.constant 0 : index
      %c0_11 = arith.constant 0 : index
      %12 = vector.load %arg8[%c0_10, %c0_11] : memref<2x128xf32, #tpu.memory_space<vmem>>, vector<2x128xf32>
      %13 = tpu.iota {dimensions = array<i32: 1>} : vector<2x128xi32>
      %cst_12 = arith.constant 0.000000e+00 : f32
      %14 = vector.broadcast %cst_12 : f32 to vector<2x128xf32>
      %cst_13 = arith.constant 0.000000e+00 : f32
      %15 = vector.broadcast %cst_13 : f32 to vector<2x1xf32>
      %c0_i32_14 = arith.constant 0 : i32
      %16 = vector.broadcast %c0_i32_14 : i32 to vector<2x128xi32>
      %17 = arith.cmpi sge, %13, %16 : vector<2x128xi32>
      %c10_i32 = arith.constant 10 : i32
      %18 = vector.broadcast %c10_i32 : i32 to vector<2x128xi32>
      %19 = arith.cmpi slt, %13, %18 : vector<2x128xi32>
      %20 = arith.andi %17, %19 : vector<2x128xi1>
      %cst_15 = arith.constant -1.000000e+30 : f32
      %21 = vector.broadcast %cst_15 : f32 to vector<2x128xf32>
      %22 = arith.select %20, %12, %21 : vector<2x128xi1>, vector<2x128xf32>
      %cst_16 = arith.constant dense<0xFF800000> : vector<2xf32>
      %23 = vector.multi_reduction <maximumf>, %22, %cst_16 [1] : vector<2x128xf32> to vector<2xf32>
      %24 = vector.shape_cast %23 : vector<2xf32> to vector<2x1xf32>
      %25 = vector.broadcast %24 : vector<2x1xf32> to vector<2x128xf32>
      %26 = arith.subf %12, %25 : vector<2x128xf32>
      %27 = math.exp %26 : vector<2x128xf32>
      %cst_17 = arith.constant 0.000000e+00 : f32
      %28 = vector.broadcast %cst_17 : f32 to vector<2x128xf32>
      %29 = arith.select %20, %27, %28 : vector<2x128xi1>, vector<2x128xf32>
      %cst_18 = arith.constant dense<0.000000e+00> : vector<2xf32>
      %30 = vector.multi_reduction <add>, %29, %cst_18 [1] : vector<2x128xf32> to vector<2xf32>
      %31 = vector.shape_cast %30 : vector<2xf32> to vector<2x1xf32>
      %32 = tpu.reciprocal %31 : vector<2x1xf32> -> vector<2x1xf32>
      %33 = vector.broadcast %32 : vector<2x1xf32> to vector<2x128xf32>
      %34 = arith.mulf %29, %33 : vector<2x128xf32>
      %35 = arith.addf %14, %34 : vector<2x128xf32>
      %36 = math.log %31 : vector<2x1xf32>
      %37 = vector.broadcast %24 : vector<2x1xf32> to vector<2x128xf32>
      %38 = arith.subf %12, %37 : vector<2x128xf32>
      %39 = arith.mulf %34, %38 : vector<2x128xf32>
      %cst_19 = arith.constant dense<0.000000e+00> : vector<2xf32>
      %40 = vector.multi_reduction <add>, %39, %cst_19 [1] : vector<2x128xf32> to vector<2xf32>
      %41 = vector.shape_cast %40 : vector<2xf32> to vector<2x1xf32>
      %42 = arith.subf %36, %41 : vector<2x1xf32>
      %43 = arith.addf %15, %42 : vector<2x1xf32>
      %c10_i32_20 = arith.constant 10 : i32
      %44 = vector.broadcast %c10_i32_20 : i32 to vector<2x128xi32>
      %45 = arith.cmpi sge, %13, %44 : vector<2x128xi32>
      %c20_i32 = arith.constant 20 : i32
      %46 = vector.broadcast %c20_i32 : i32 to vector<2x128xi32>
      %47 = arith.cmpi slt, %13, %46 : vector<2x128xi32>
      %48 = arith.andi %45, %47 : vector<2x128xi1>
      %cst_21 = arith.constant -1.000000e+30 : f32
      %49 = vector.broadcast %cst_21 : f32 to vector<2x128xf32>
      %50 = arith.select %48, %12, %49 : vector<2x128xi1>, vector<2x128xf32>
      %cst_22 = arith.constant dense<0xFF800000> : vector<2xf32>
      %51 = vector.multi_reduction <maximumf>, %50, %cst_22 [1] : vector<2x128xf32> to vector<2xf32>
      %52 = vector.shape_cast %51 : vector<2xf32> to vector<2x1xf32>
      %53 = vector.broadcast %52 : vector<2x1xf32> to vector<2x128xf32>
      %54 = arith.subf %12, %53 : vector<2x128xf32>
      %55 = math.exp %54 : vector<2x128xf32>
      %cst_23 = arith.constant 0.000000e+00 : f32
      %56 = vector.broadcast %cst_23 : f32 to vector<2x128xf32>
      %57 = arith.select %48, %55, %56 : vector<2x128xi1>, vector<2x128xf32>
      %cst_24 = arith.constant dense<0.000000e+00> : vector<2xf32>
      %58 = vector.multi_reduction <add>, %57, %cst_24 [1] : vector<2x128xf32> to vector<2xf32>
      %59 = vector.shape_cast %58 : vector<2xf32> to vector<2x1xf32>
      %60 = tpu.reciprocal %59 : vector<2x1xf32> -> vector<2x1xf32>
      %61 = vector.broadcast %60 : vector<2x1xf32> to vector<2x128xf32>
      %62 = arith.mulf %57, %61 : vector<2x128xf32>
      %63 = arith.addf %35, %62 : vector<2x128xf32>
      %64 = math.log %59 : vector<2x1xf32>
      %65 = vector.broadcast %52 : vector<2x1xf32> to vector<2x128xf32>
      %66 = arith.subf %12, %65 : vector<2x128xf32>
      %67 = arith.mulf %62, %66 : vector<2x128xf32>
      %cst_25 = arith.constant dense<0.000000e+00> : vector<2xf32>
      %68 = vector.multi_reduction <add>, %67, %cst_25 [1] : vector<2x128xf32> to vector<2xf32>
      %69 = vector.shape_cast %68 : vector<2xf32> to vector<2x1xf32>
      %70 = arith.subf %64, %69 : vector<2x1xf32>
      %71 = arith.addf %43, %70 : vector<2x1xf32>
      %c20_i32_26 = arith.constant 20 : i32
      %72 = vector.broadcast %c20_i32_26 : i32 to vector<2x128xi32>
      %73 = arith.cmpi sge, %13, %72 : vector<2x128xi32>
      %c30_i32 = arith.constant 30 : i32
      %74 = vector.broadcast %c30_i32 : i32 to vector<2x128xi32>
      %75 = arith.cmpi slt, %13, %74 : vector<2x128xi32>
      %76 = arith.andi %73, %75 : vector<2x128xi1>
      %cst_27 = arith.constant -1.000000e+30 : f32
      %77 = vector.broadcast %cst_27 : f32 to vector<2x128xf32>
      %78 = arith.select %76, %12, %77 : vector<2x128xi1>, vector<2x128xf32>
      %cst_28 = arith.constant dense<0xFF800000> : vector<2xf32>
      %79 = vector.multi_reduction <maximumf>, %78, %cst_28 [1] : vector<2x128xf32> to vector<2xf32>
      %80 = vector.shape_cast %79 : vector<2xf32> to vector<2x1xf32>
      %81 = vector.broadcast %80 : vector<2x1xf32> to vector<2x128xf32>
      %82 = arith.subf %12, %81 : vector<2x128xf32>
      %83 = math.exp %82 : vector<2x128xf32>
      %cst_29 = arith.constant 0.000000e+00 : f32
      %84 = vector.broadcast %cst_29 : f32 to vector<2x128xf32>
      %85 = arith.select %76, %83, %84 : vector<2x128xi1>, vector<2x128xf32>
      %cst_30 = arith.constant dense<0.000000e+00> : vector<2xf32>
      %86 = vector.multi_reduction <add>, %85, %cst_30 [1] : vector<2x128xf32> to vector<2xf32>
      %87 = vector.shape_cast %86 : vector<2xf32> to vector<2x1xf32>
      %88 = tpu.reciprocal %87 : vector<2x1xf32> -> vector<2x1xf32>
      %89 = vector.broadcast %88 : vector<2x1xf32> to vector<2x128xf32>
      %90 = arith.mulf %85, %89 : vector<2x128xf32>
      %91 = arith.addf %63, %90 : vector<2x128xf32>
      %92 = math.log %87 : vector<2x1xf32>
      %93 = vector.broadcast %80 : vector<2x1xf32> to vector<2x128xf32>
      %94 = arith.subf %12, %93 : vector<2x128xf32>
      %95 = arith.mulf %90, %94 : vector<2x128xf32>
      %cst_31 = arith.constant dense<0.000000e+00> : vector<2xf32>
      %96 = vector.multi_reduction <add>, %95, %cst_31 [1] : vector<2x128xf32> to vector<2xf32>
      %97 = vector.shape_cast %96 : vector<2xf32> to vector<2x1xf32>
      %98 = arith.subf %92, %97 : vector<2x1xf32>
      %99 = arith.addf %71, %98 : vector<2x1xf32>
      %c30_i32_32 = arith.constant 30 : i32
      %100 = vector.broadcast %c30_i32_32 : i32 to vector<2x128xi32>
      %101 = arith.cmpi sge, %13, %100 : vector<2x128xi32>
      %c40_i32 = arith.constant 40 : i32
      %102 = vector.broadcast %c40_i32 : i32 to vector<2x128xi32>
      %103 = arith.cmpi slt, %13, %102 : vector<2x128xi32>
      %104 = arith.andi %101, %103 : vector<2x128xi1>
      %cst_33 = arith.constant -1.000000e+30 : f32
      %105 = vector.broadcast %cst_33 : f32 to vector<2x128xf32>
      %106 = arith.select %104, %12, %105 : vector<2x128xi1>, vector<2x128xf32>
      %cst_34 = arith.constant dense<0xFF800000> : vector<2xf32>
      %107 = vector.multi_reduction <maximumf>, %106, %cst_34 [1] : vector<2x128xf32> to vector<2xf32>
      %108 = vector.shape_cast %107 : vector<2xf32> to vector<2x1xf32>
      %109 = vector.broadcast %108 : vector<2x1xf32> to vector<2x128xf32>
      %110 = arith.subf %12, %109 : vector<2x128xf32>
      %111 = math.exp %110 : vector<2x128xf32>
      %cst_35 = arith.constant 0.000000e+00 : f32
      %112 = vector.broadcast %cst_35 : f32 to vector<2x128xf32>
      %113 = arith.select %104, %111, %112 : vector<2x128xi1>, vector<2x128xf32>
      %cst_36 = arith.constant dense<0.000000e+00> : vector<2xf32>
      %114 = vector.multi_reduction <add>, %113, %cst_36 [1] : vector<2x128xf32> to vector<2xf32>
      %115 = vector.shape_cast %114 : vector<2xf32> to vector<2x1xf32>
      %116 = tpu.reciprocal %115 : vector<2x1xf32> -> vector<2x1xf32>
      %117 = vector.broadcast %116 : vector<2x1xf32> to vector<2x128xf32>
      %118 = arith.mulf %113, %117 : vector<2x128xf32>
      %119 = arith.addf %91, %118 : vector<2x128xf32>
      %120 = math.log %115 : vector<2x1xf32>
      %121 = vector.broadcast %108 : vector<2x1xf32> to vector<2x128xf32>
      %122 = arith.subf %12, %121 : vector<2x128xf32>
      %123 = arith.mulf %118, %122 : vector<2x128xf32>
      %cst_37 = arith.constant dense<0.000000e+00> : vector<2xf32>
      %124 = vector.multi_reduction <add>, %123, %cst_37 [1] : vector<2x128xf32> to vector<2xf32>
      %125 = vector.shape_cast %124 : vector<2xf32> to vector<2x1xf32>
      %126 = arith.subf %120, %125 : vector<2x1xf32>
      %127 = arith.addf %99, %126 : vector<2x1xf32>
      %c40_i32_38 = arith.constant 40 : i32
      %128 = vector.broadcast %c40_i32_38 : i32 to vector<2x128xi32>
      %129 = arith.cmpi slt, %13, %128 : vector<2x128xi32>
      %cst_39 = arith.constant 0.000000e+00 : f32
      %130 = vector.broadcast %cst_39 : f32 to vector<2x128xf32>
      %131 = arith.select %129, %12, %130 : vector<2x128xi1>, vector<2x128xf32>
      %c0_40 = arith.constant 0 : index
      %c0_41 = arith.constant 0 : index
      %132 = vector.load %arg5[%c0_40, %c0_41] : memref<2x128xf32, #tpu.memory_space<vmem>>, vector<2x128xf32>
      tpu.vector_store %arg5[%c0_40, %c0_41], %131 {strides = array<i32>} : memref<2x128xf32, #tpu.memory_space<vmem>>, vector<2x128xf32>,
      %c0_42 = arith.constant 0 : index
      %c0_43 = arith.constant 0 : index
      %133 = vector.load %arg6[%c0_42, %c0_43] : memref<2x128xf32, #tpu.memory_space<vmem>>, vector<2x128xf32>
      tpu.vector_store %arg6[%c0_42, %c0_43], %119 {strides = array<i32>} : memref<2x128xf32, #tpu.memory_space<vmem>>, vector<2x128xf32>,
      %cst_44 = arith.constant 2.500000e-01 : f32
      %134 = vector.broadcast %cst_44 : f32 to vector<2x1xf32>
      %135 = arith.mulf %127, %134 : vector<2x1xf32>
      %136 = vector.shape_cast %135 : vector<2x1xf32> to vector<2x1xf32>
      %137 = vector.broadcast %136 : vector<2x1xf32> to vector<2x128xf32>
      %c0_45 = arith.constant 0 : index
      %c0_46 = arith.constant 0 : index
      %138 = vector.load %arg7[%c0_45, %c0_46] : memref<2x128xf32, #tpu.memory_space<vmem>>, vector<2x128xf32>
      tpu.vector_store %arg7[%c0_45, %c0_46], %137 {strides = array<i32>} : memref<2x128xf32, #tpu.memory_space<vmem>>, vector<2x128xf32>,
    } else {
    }
    return
  }
  func.func @transform_0(%arg0: i32, %arg1: i32) -> (i32, i32) {
    %c0_i32 = arith.constant 0 : i32
    return %arg0, %arg1 : i32, i32
  }
  func.func @transform_1(%arg0: i32, %arg1: i32) -> (i32, i32) {
    %c0_i32 = arith.constant 0 : i32
    %c0_i32_0 = arith.constant 0 : i32
    return %arg1, %c0_i32 : i32, i32
  }
  func.func @transform_2(%arg0: i32, %arg1: i32) -> (i32, i32) {
    %c0_i32 = arith.constant 0 : i32
    %c0_i32_0 = arith.constant 0 : i32
    %c0_i32_1 = arith.constant 0 : i32
    return %c0_i32, %c0_i32_0 : i32, i32
  }
  func.func @transform_3(%arg0: i32, %arg1: i32) -> (i32, i32) {
    %c0_i32 = arith.constant 0 : i32
    %c0_i32_0 = arith.constant 0 : i32
    return %arg0, %c0_i32 : i32, i32
  }
  func.func @transform_4(%arg0: i32, %arg1: i32) -> (i32, i32) {
    %c0_i32 = arith.constant 0 : i32
    %c0_i32_0 = arith.constant 0 : i32
    return %arg0, %c0_i32 : i32, i32
  }
  func.func @transform_5(%arg0: i32, %arg1: i32) -> (i32, i32) {
    %c0_i32 = arith.constant 0 : i32
    %c0_i32_0 = arith.constant 0 : i32
    return %arg0, %c0_i32 : i32, i32
  }
}

</mosaic_0001>

<llo_original>
// kernel: bayeswrap_forward.1
$region0: #{bayeswrap_forward.1}
  #allocation0 [shape = 'u32[]', space=smem, size = 0x4, offset = 0x4, fixed_abs, tag = 'smem constant byte address 0x4 - core index']
  #allocation1 [shape = 'u32[144,128]{1,0:T(1,128)}', space=vmem, size = 0x12000, scoped, tag = 'internal scratch']
  #allocation2 [shape = 'f32[2,128]{1,0:T(2,128)}', space=vmem, size = 0x400, scoped, tag = 'scratch operand']
  %s0 = inlined_call_operand.vmem [shape: bf16[2,1024], index: 0, kind: input, shape index: {}]
  %s1 = inlined_call_operand.hbm [shape: bf16[1024,128], index: 1, kind: input, shape index: {}]
  %s2 = inlined_call_operand.vmem [shape: f32[1,128], index: 2, kind: input, shape index: {}]
  %s3 = inlined_call_operand.vmem [shape: f32[2,128], index: 3, kind: output, shape index: {0}]
  %s4 = inlined_call_operand.vmem [shape: f32[2,128], index: 4, kind: output, shape index: {1}]
  %s5 = inlined_call_operand.vmem [shape: f32[2,128], index: 5, kind: output, shape index: {2}]
  %6 = xla_tuple %s3, %s4, %s5
  %s7 = sld [smem:[#allocation0]]
  $region50: #{bayeswrap_forward.1} parent=0
    _
  %s9 = ssub.s32 1, %s7
  %s10 = scalar_select 0, %s9, %s7
  $region1: #{bayeswrap_forward.1} parent=0
    #allocation3 [shape = 'u8[262144]{0}', space=vmem, size = 0x40000, scoped, tag = 'input window, operand 1, single buffered']
    #allocation4 [shape = 's32[1]{0}', space=sflag, size = 0x4, scoped, tag = 'scoped memory for bayeswrap_forward.1']
    %11 = vsyncpa [#allocation4], 0
    // Predicated region
    $region2: #{bayeswrap_forward.1} parent=1 // pred_check
      _
    $region3: #{bayeswrap_forward.1} parent=1 // pred_check_branch
      %13 = sbr.rel (0) target = $region5
    $region4: #{bayeswrap_forward.1} parent=1 // pred_region
      _
    $region5: #{bayeswrap_forward.1} parent=1 // pred_fallthru
      _
    // Predicated region
    $region6: #{bayeswrap_forward.1} parent=1 // pred_check
      _
    $region7: #{bayeswrap_forward.1} parent=1 // pred_check_branch
      %15 = sbr.rel (0) target = $region9
    $region8: #{bayeswrap_forward.1} parent=1 // pred_region
      %s17 = ssub.s32 8192, 8192
      %18 = vsyncadd [#allocation4], %s17
      %s19 = sshll.u32 [#allocation3], 4
      %s20 = int_to_ptr.vmem [resolvable:$true] %s19
      %25 = dma.hbm_to_vmem [thread:$0]  %s1, 8192, %s20, [#allocation4], 64, 64, 4
    $region9: #{bayeswrap_forward.1} parent=1 // pred_fallthru
      _
    // Predicated region
    $region10: #{bayeswrap_forward.1} parent=1 // pred_check
      _
    $region11: #{bayeswrap_forward.1} parent=1 // pred_check_branch
      %27 = sbr.rel (0) target = $region13
    $region12: #{bayeswrap_forward.1} parent=1 // pred_region
      _
    $region13: #{bayeswrap_forward.1} parent=1 // pred_fallthru
      _
    // Predicated region
    $region14: #{bayeswrap_forward.1} parent=1 // pred_check
      _
    $region15: #{bayeswrap_forward.1} parent=1 // pred_check_branch
      %29 = sbr.rel (0) target = $region17
    $region16: #{bayeswrap_forward.1} parent=1 // pred_region
      %30 = dma.done [#allocation4], 8192
    $region17: #{bayeswrap_forward.1} parent=1 // pred_fallthru
      _
    %p32 = scmp.eq.s32.totalorder 0, 0
    // Predicated region
    $region18: #{bayeswrap_forward.1} parent=1 // pred_check
      %p33 = pneg %p32
    $region19: #{bayeswrap_forward.1} parent=1 // pred_check_branch
      %35 = sbr.rel (%p33) target = $region21
    $region20: #{bayeswrap_forward.1} parent=1 // pred_region
      %v36 = vld [vmem:[%s2] sm:$0x1]
      %v38 = vlaneseq
      %v39 = vshrl.u32 %v38, 7
      %v40 = vsub.s32 0, %v39
      %v41 = vrot.slane %v36, %v40
      %43 = vst [vmem:[#allocation2] sm:$0x3] %v41
    $region21: #{bayeswrap_forward.1} parent=1 // pred_fallthru
      _
    %v44 = vld [vmem:[#allocation2] sm:$0x3]
    %v45 = vld [vmem:[%s0] sm:$0xff]
    %v46 = vld [vmem:[#allocation3] sm:$0xf]
    %v47 = vld [vmem:[#allocation3 + $0x4] sm:$0xf]
    %v48 = vld [vmem:[#allocation3 + $0x8] sm:$0xf]
    %v49 = vld [vmem:[#allocation3 + $0xc] sm:$0xf]
    %v50 = vld [vmem:[#allocation3 + $0x10] sm:$0xf]
    %v51 = vld [vmem:[#allocation3 + $0x14] sm:$0xf]
    %v52 = vld [vmem:[#allocation3 + $0x18] sm:$0xf]
    %v53 = vld [vmem:[#allocation3 + $0x1c] sm:$0xf]
    %v54 = vld [vmem:[#allocation3 + $0x20] sm:$0xf]
    %v55 = vld [vmem:[#allocation3 + $0x24] sm:$0xf]
    %v56 = vld [vmem:[#allocation3 + $0x28] sm:$0xf]
    %v57 = vld [vmem:[#allocation3 + $0x2c] sm:$0xf]
    %v58 = vld [vmem:[#allocation3 + $0x30] sm:$0xf]
    %v59 = vld [vmem:[#allocation3 + $0x34] sm:$0xf]
    %v60 = vld [vmem:[#allocation3 + $0x38] sm:$0xf]
    %v61 = vld [vmem:[#allocation3 + $0x3c] sm:$0xf]
    %v62 = vld [vmem:[#allocation3 + $0x40] sm:$0xf]
    %v63 = vld [vmem:[#allocation3 + $0x44] sm:$0xf]
    %v64 = vld [vmem:[#allocation3 + $0x48] sm:$0xf]
    %v65 = vld [vmem:[#allocation3 + $0x4c] sm:$0xf]
    %v66 = vld [vmem:[#allocation3 + $0x50] sm:$0xf]
    %v67 = vld [vmem:[#allocation3 + $0x54] sm:$0xf]
    %v68 = vld [vmem:[#allocation3 + $0x58] sm:$0xf]
    %v69 = vld [vmem:[#allocation3 + $0x5c] sm:$0xf]
    %v70 = vld [vmem:[#allocation3 + $0x60] sm:$0xf]
    %v71 = vld [vmem:[#allocation3 + $0x64] sm:$0xf]
    %v72 = vld [vmem:[#allocation3 + $0x68] sm:$0xf]
    %v73 = vld [vmem:[#allocation3 + $0x6c] sm:$0xf]
    %v74 = vld [vmem:[#allocation3 + $0x70] sm:$0xf]
    %v75 = vld [vmem:[#allocation3 + $0x74] sm:$0xf]
    %v76 = vld [vmem:[#allocation3 + $0x78] sm:$0xf]
    %v77 = vld [vmem:[#allocation3 + $0x7c] sm:$0xf]
    %v78 = vld [vmem:[#allocation3 + $0x80] sm:$0xf]
    %v79 = vld [vmem:[#allocation3 + $0x84] sm:$0xf]
    %v80 = vld [vmem:[#allocation3 + $0x88] sm:$0xf]
    %v81 = vld [vmem:[#allocation3 + $0x8c] sm:$0xf]
    %v82 = vld [vmem:[#allocation3 + $0x90] sm:$0xf]
    %v83 = vld [vmem:[#allocation3 + $0x94] sm:$0xf]
    %v84 = vld [vmem:[#allocation3 + $0x98] sm:$0xf]
    %v85 = vld [vmem:[#allocation3 + $0x9c] sm:$0xf]
    %v86 = vld [vmem:[#allocation3 + $0xa0] sm:$0xf]
    %v87 = vld [vmem:[#allocation3 + $0xa4] sm:$0xf]
    %v88 = vld [vmem:[#allocation3 + $0xa8] sm:$0xf]
    %v89 = vld [vmem:[#allocation3 + $0xac] sm:$0xf]
    %v90 = vld [vmem:[#allocation3 + $0xb0] sm:$0xf]
    %v91 = vld [vmem:[#allocation3 + $0xb4] sm:$0xf]
    %v92 = vld [vmem:[#allocation3 + $0xb8] sm:$0xf]
    %v93 = vld [vmem:[#allocation3 + $0xbc] sm:$0xf]
    %v94 = vld [vmem:[#allocation3 + $0xc0] sm:$0xf]
    %v95 = vld [vmem:[#allocation3 + $0xc4] sm:$0xf]
    %v96 = vld [vmem:[#allocation3 + $0xc8] sm:$0xf]
    %v97 = vld [vmem:[#allocation3 + $0xcc] sm:$0xf]
    %v98 = vld [vmem:[#allocation3 + $0xd0] sm:$0xf]
    %v99 = vld [vmem:[#allocation3 + $0xd4] sm:$0xf]
    %v100 = vld [vmem:[#allocation3 + $0xd8] sm:$0xf]
    %v101 = vld [vmem:[#allocation3 + $0xdc] sm:$0xf]
    %v102 = vld [vmem:[#allocation3 + $0xe0] sm:$0xf]
    %v103 = vld [vmem:[#allocation3 + $0xe4] sm:$0xf]
    %v104 = vld [vmem:[#allocation3 + $0xe8] sm:$0xf]
    %v105 = vld [vmem:[#allocation3 + $0xec] sm:$0xf]
    %v106 = vld [vmem:[#allocation3 + $0xf0] sm:$0xf]
    %v107 = vld [vmem:[#allocation3 + $0xf4] sm:$0xf]
    %v108 = vld [vmem:[#allocation3 + $0xf8] sm:$0xf]
    %v109 = vld [vmem:[#allocation3 + $0xfc] sm:$0xf]
    %v110 = vld [vmem:[#allocation3 + $0x100] sm:$0xf]
    %v111 = vld [vmem:[#allocation3 + $0x104] sm:$0xf]
    %v112 = vld [vmem:[#allocation3 + $0x108] sm:$0xf]
    %v113 = vld [vmem:[#allocation3 + $0x10c] sm:$0xf]
    %v114 = vld [vmem:[#allocation3 + $0x110] sm:$0xf]
    %v115 = vld [vmem:[#allocation3 + $0x114] sm:$0xf]
    %v116 = vld [vmem:[#allocation3 + $0x118] sm:$0xf]
    %v117 = vld [vmem:[#allocation3 + $0x11c] sm:$0xf]
    %v118 = vld [vmem:[#allocation3 + $0x120] sm:$0xf]
    %v119 = vld [vmem:[#allocation3 + $0x124] sm:$0xf]
    %v120 = vld [vmem:[#allocation3 + $0x128] sm:$0xf]
    %v121 = vld [vmem:[#allocation3 + $0x12c] sm:$0xf]
    %v122 = vld [vmem:[#allocation3 + $0x130] sm:$0xf]
    %v123 = vld [vmem:[#allocation3 + $0x134] sm:$0xf]
    %v124 = vld [vmem:[#allocation3 + $0x138] sm:$0xf]
    %v125 = vld [vmem:[#allocation3 + $0x13c] sm:$0xf]
    %v126 = vld [vmem:[#allocation3 + $0x140] sm:$0xf]
    %v127 = vld [vmem:[#allocation3 + $0x144] sm:$0xf]
    %v128 = vld [vmem:[#allocation3 + $0x148] sm:$0xf]
    %v129 = vld [vmem:[#allocation3 + $0x14c] sm:$0xf]
    %v130 = vld [vmem:[#allocation3 + $0x150] sm:$0xf]
    %v131 = vld [vmem:[#allocation3 + $0x154] sm:$0xf]
    %v132 = vld [vmem:[#allocation3 + $0x158] sm:$0xf]
    %v133 = vld [vmem:[#allocation3 + $0x15c] sm:$0xf]
    %v134 = vld [vmem:[#allocation3 + $0x160] sm:$0xf]
    %v135 = vld [vmem:[#allocation3 + $0x164] sm:$0xf]
    %v136 = vld [vmem:[#allocation3 + $0x168] sm:$0xf]
    %v137 = vld [vmem:[#allocation3 + $0x16c] sm:$0xf]
    %v138 = vld [vmem:[#allocation3 + $0x170] sm:$0xf]
    %v139 = vld [vmem:[#allocation3 + $0x174] sm:$0xf]
    %v140 = vld [vmem:[#allocation3 + $0x178] sm:$0xf]
    %v141 = vld [vmem:[#allocation3 + $0x17c] sm:$0xf]
    %v142 = vld [vmem:[#allocation3 + $0x180] sm:$0xf]
    %v143 = vld [vmem:[#allocation3 + $0x184] sm:$0xf]
    %v144 = vld [vmem:[#allocation3 + $0x188] sm:$0xf]
    %v145 = vld [vmem:[#allocation3 + $0x18c] sm:$0xf]
    %v146 = vld [vmem:[#allocation3 + $0x190] sm:$0xf]
    %v147 = vld [vmem:[#allocation3 + $0x194] sm:$0xf]
    %v148 = vld [vmem:[#allocation3 + $0x198] sm:$0xf]
    %v149 = vld [vmem:[#allocation3 + $0x19c] sm:$0xf]
    %v150 = vld [vmem:[#allocation3 + $0x1a0] sm:$0xf]
    %v151 = vld [vmem:[#allocation3 + $0x1a4] sm:$0xf]
    %v152 = vld [vmem:[#allocation3 + $0x1a8] sm:$0xf]
    %v153 = vld [vmem:[#allocation3 + $0x1ac] sm:$0xf]
    %v154 = vld [vmem:[#allocation3 + $0x1b0] sm:$0xf]
    %v155 = vld [vmem:[#allocation3 + $0x1b4] sm:$0xf]
    %v156 = vld [vmem:[#allocation3 + $0x1b8] sm:$0xf]
    %v157 = vld [vmem:[#allocation3 + $0x1bc] sm:$0xf]
    %v158 = vld [vmem:[#allocation3 + $0x1c0] sm:$0xf]
    %v159 = vld [vmem:[#allocation3 + $0x1c4] sm:$0xf]
    %v160 = vld [vmem:[#allocation3 + $0x1c8] sm:$0xf]
    %v161 = vld [vmem:[#allocation3 + $0x1cc] sm:$0xf]
    %v162 = vld [vmem:[#allocation3 + $0x1d0] sm:$0xf]
    %v163 = vld [vmem:[#allocation3 + $0x1d4] sm:$0xf]
    %v164 = vld [vmem:[#allocation3 + $0x1d8] sm:$0xf]
    %v165 = vld [vmem:[#allocation3 + $0x1dc] sm:$0xf]
    %v166 = vld [vmem:[#allocation3 + $0x1e0] sm:$0xf]
    %v167 = vld [vmem:[#allocation3 + $0x1e4] sm:$0xf]
    %v168 = vld [vmem:[#allocation3 + $0x1e8] sm:$0xf]
    %v169 = vld [vmem:[#allocation3 + $0x1ec] sm:$0xf]
    %v170 = vld [vmem:[#allocation3 + $0x1f0] sm:$0xf]
    %v171 = vld [vmem:[#allocation3 + $0x1f4] sm:$0xf]
    %v172 = vld [vmem:[#allocation3 + $0x1f8] sm:$0xf]
    %v173 = vld [vmem:[#allocation3 + $0x1fc] sm:$0xf]
    %v175 = vcombine.high %v45, %v45
    %v177 = vunpack.c.l.s4 1966171168
    %v178 = vunpack.c.0.s8 %v177
    %v179 = vlaneseq
    %v180 = vshrl.u32 %v179, 7
    %v181 = vsub.s32 %v178, %v180
    %v182 = vrot.slane %v45, %v181
    %v184 = vunpack.c.l.s4 1966171168
    %v185 = vunpack.c.0.s8 %v184
    %v186 = vlaneseq
    %v187 = vshrl.u32 %v186, 7
    %v188 = vsub.s32 %v185, %v187
    %v189 = vrot.slane %v175, %v188
    %v190 = vcombine.high %v182, %v182
    %v191 = vcombine.high %v189, %v189
    %v193 = vunpack.c.l.s4 1966171168
    %v194 = vunpack.c.0.s8 %v193
    %v195 = vlaneseq
    %v196 = vshrl.u32 %v195, 7
    %v197 = vsub.s32 %v194, %v196
    %v198 = vrot.slane %v182, %v197
    %v200 = vunpack.c.l.s4 1966171168
    %v201 = vunpack.c.0.s8 %v200
    %v202 = vlaneseq
    %v203 = vshrl.u32 %v202, 7
    %v204 = vsub.s32 %v201, %v203
    %v205 = vrot.slane %v189, %v204
    %v207 = vunpack.c.l.s4 1966171168
    %v208 = vunpack.c.0.s8 %v207
    %v209 = vlaneseq
    %v210 = vshrl.u32 %v209, 7
    %v211 = vsub.s32 %v208, %v210
    %v212 = vrot.slane %v190, %v211
    %v214 = vunpack.c.l.s4 1966171168
    %v215 = vunpack.c.0.s8 %v214
    %v216 = vlaneseq
    %v217 = vshrl.u32 %v216, 7
    %v218 = vsub.s32 %v215, %v217
    %v219 = vrot.slane %v191, %v218
    %v220 = vcombine.high %v198, %v198
    %v221 = vcombine.high %v205, %v205
    %v222 = vcombine.high %v212, %v212
    %v223 = vcombine.high %v219, %v219
    %v360 = vunpack.c.l.b16 %v46
    %v361 = vunpack.c.l.b16 %v47
    %v362 = vunpack.c.l.b16 %v48
    %v363 = vunpack.c.l.b16 %v49
    %v364 = vunpack.c.l.b16 %v50
    %v365 = vunpack.c.l.b16 %v51
    %v366 = vunpack.c.l.b16 %v52
    %v367 = vunpack.c.l.b16 %v53
    %v368 = vunpack.c.l.b16 %v54
    %v369 = vunpack.c.l.b16 %v55
    %v370 = vunpack.c.l.b16 %v56
    %v371 = vunpack.c.l.b16 %v57
    %v372 = vunpack.c.l.b16 %v58
    %v373 = vunpack.c.l.b16 %v59
    %v374 = vunpack.c.l.b16 %v60
    %v375 = vunpack.c.l.b16 %v61
    %v376 = vunpack.c.l.b16 %v62
    %v377 = vunpack.c.l.b16 %v63
    %v378 = vunpack.c.l.b16 %v64
    %v379 = vunpack.c.l.b16 %v65
    %v380 = vunpack.c.l.b16 %v66
    %v381 = vunpack.c.l.b16 %v67
    %v382 = vunpack.c.l.b16 %v68
    %v383 = vunpack.c.l.b16 %v69
    %v384 = vunpack.c.l.b16 %v70
    %v385 = vunpack.c.l.b16 %v71
    %v386 = vunpack.c.l.b16 %v72
    %v387 = vunpack.c.l.b16 %v73
    %v388 = vunpack.c.l.b16 %v74
    %v389 = vunpack.c.l.b16 %v75
    %v390 = vunpack.c.l.b16 %v76
    %v391 = vunpack.c.l.b16 %v77
    %v392 = vunpack.c.l.b16 %v78
    %v393 = vunpack.c.l.b16 %v79
    %v394 = vunpack.c.l.b16 %v80
    %v395 = vunpack.c.l.b16 %v81
    %v396 = vunpack.c.l.b16 %v82
    %v397 = vunpack.c.l.b16 %v83
    %v398 = vunpack.c.l.b16 %v84
    %v399 = vunpack.c.l.b16 %v85
    %v400 = vunpack.c.l.b16 %v86
    %v401 = vunpack.c.l.b16 %v87
    %v402 = vunpack.c.l.b16 %v88
    %v403 = vunpack.c.l.b16 %v89
    %v404 = vunpack.c.l.b16 %v90
    %v405 = vunpack.c.l.b16 %v91
    %v406 = vunpack.c.l.b16 %v92
    %v407 = vunpack.c.l.b16 %v93
    %v408 = vunpack.c.l.b16 %v94
    %v409 = vunpack.c.l.b16 %v95
    %v410 = vunpack.c.l.b16 %v96
    %v411 = vunpack.c.l.b16 %v97
    %v412 = vunpack.c.l.b16 %v98
    %v413 = vunpack.c.l.b16 %v99
    %v414 = vunpack.c.l.b16 %v100
    %v415 = vunpack.c.l.b16 %v101
    %v416 = vunpack.c.l.b16 %v102
    %v417 = vunpack.c.l.b16 %v103
    %v418 = vunpack.c.l.b16 %v104
    %v419 = vunpack.c.l.b16 %v105
    %v420 = vunpack.c.l.b16 %v106
    %v421 = vunpack.c.l.b16 %v107
    %v422 = vunpack.c.l.b16 %v108
    %v423 = vunpack.c.l.b16 %v109
    %v424 = vunpack.c.l.b16 %v110
    %v425 = vunpack.c.l.b16 %v111
    %v426 = vunpack.c.l.b16 %v112
    %v427 = vunpack.c.l.b16 %v113
    %v428 = vunpack.c.l.b16 %v114
    %v429 = vunpack.c.l.b16 %v115
    %v430 = vunpack.c.l.b16 %v116
    %v431 = vunpack.c.l.b16 %v117
    %v432 = vunpack.c.l.b16 %v118
    %v433 = vunpack.c.l.b16 %v119
    %v434 = vunpack.c.l.b16 %v120
    %v435 = vunpack.c.l.b16 %v121
    %v436 = vunpack.c.l.b16 %v122
    %v437 = vunpack.c.l.b16 %v123
    %v438 = vunpack.c.l.b16 %v124
    %v439 = vunpack.c.l.b16 %v125
    %v440 = vunpack.c.l.b16 %v126
    %v441 = vunpack.c.l.b16 %v127
    %v442 = vunpack.c.l.b16 %v128
    %v443 = vunpack.c.l.b16 %v129
    %v444 = vunpack.c.l.b16 %v130
    %v445 = vunpack.c.l.b16 %v131
    %v446 = vunpack.c.l.b16 %v132
    %v447 = vunpack.c.l.b16 %v133
    %v448 = vunpack.c.l.b16 %v134
    %v449 = vunpack.c.l.b16 %v135
    %v450 = vunpack.c.l.b16 %v136
    %v451 = vunpack.c.l.b16 %v137
    %v452 = vunpack.c.l.b16 %v138
    %v453 = vunpack.c.l.b16 %v139
    %v454 = vunpack.c.l.b16 %v140
    %v455 = vunpack.c.l.b16 %v141
    %v456 = vunpack.c.l.b16 %v142
    %v457 = vunpack.c.l.b16 %v143
    %v458 = vunpack.c.l.b16 %v144
    %v459 = vunpack.c.l.b16 %v145
    %v460 = vunpack.c.l.b16 %v146
    %v461 = vunpack.c.l.b16 %v147
    %v462 = vunpack.c.l.b16 %v148
    %v463 = vunpack.c.l.b16 %v149
    %v464 = vunpack.c.l.b16 %v150
    %v465 = vunpack.c.l.b16 %v151
    %v466 = vunpack.c.l.b16 %v152
    %v467 = vunpack.c.l.b16 %v153
    %v468 = vunpack.c.l.b16 %v154
    %v469 = vunpack.c.l.b16 %v155
    %v470 = vunpack.c.l.b16 %v156
    %v471 = vunpack.c.l.b16 %v157
    %v472 = vunpack.c.l.b16 %v158
    %v473 = vunpack.c.l.b16 %v159
    %v474 = vunpack.c.l.b16 %v160
    %v475 = vunpack.c.l.b16 %v161
    %v476 = vunpack.c.l.b16 %v162
    %v477 = vunpack.c.l.b16 %v163
    %v478 = vunpack.c.l.b16 %v164
    %v479 = vunpack.c.l.b16 %v165
    %v480 = vunpack.c.l.b16 %v166
    %v481 = vunpack.c.l.b16 %v167
    %v482 = vunpack.c.l.b16 %v168
    %v483 = vunpack.c.l.b16 %v169
    %v484 = vunpack.c.l.b16 %v170
    %v485 = vunpack.c.l.b16 %v171
    %v486 = vunpack.c.l.b16 %v172
    %v487 = vunpack.c.l.b16 %v173
    %v488 = vpack.c.b16 %v361, %v360
    %v489 = vpack.c.b16 %v363, %v362
    %v490 = vpack.c.b16 %v365, %v364
    %v491 = vpack.c.b16 %v367, %v366
    %v492 = vpack.c.b16 %v369, %v368
    %v493 = vpack.c.b16 %v371, %v370
    %v494 = vpack.c.b16 %v373, %v372
    %v495 = vpack.c.b16 %v375, %v374
    %v496 = vpack.c.b16 %v377, %v376
    %v497 = vpack.c.b16 %v379, %v378
    %v498 = vpack.c.b16 %v381, %v380
    %v499 = vpack.c.b16 %v383, %v382
    %v500 = vpack.c.b16 %v385, %v384
    %v501 = vpack.c.b16 %v387, %v386
    %v502 = vpack.c.b16 %v389, %v388
    %v503 = vpack.c.b16 %v391, %v390
    %v504 = vpack.c.b16 %v393, %v392
    %v505 = vpack.c.b16 %v395, %v394
    %v506 = vpack.c.b16 %v397, %v396
    %v507 = vpack.c.b16 %v399, %v398
    %v508 = vpack.c.b16 %v401, %v400
    %v509 = vpack.c.b16 %v403, %v402
    %v510 = vpack.c.b16 %v405, %v404
    %v511 = vpack.c.b16 %v407, %v406
    %v512 = vpack.c.b16 %v409, %v408
    %v513 = vpack.c.b16 %v411, %v410
    %v514 = vpack.c.b16 %v413, %v412
    %v515 = vpack.c.b16 %v415, %v414
    %v516 = vpack.c.b16 %v417, %v416
    %v517 = vpack.c.b16 %v419, %v418
    %v518 = vpack.c.b16 %v421, %v420
    %v519 = vpack.c.b16 %v423, %v422
    %v520 = vpack.c.b16 %v425, %v424
    %v521 = vpack.c.b16 %v427, %v426
    %v522 = vpack.c.b16 %v429, %v428
    %v523 = vpack.c.b16 %v431, %v430
    %v524 = vpack.c.b16 %v433, %v432
    %v525 = vpack.c.b16 %v435, %v434
    %v526 = vpack.c.b16 %v437, %v436
    %v527 = vpack.c.b16 %v439, %v438
    %v528 = vpack.c.b16 %v441, %v440
    %v529 = vpack.c.b16 %v443, %v442
    %v530 = vpack.c.b16 %v445, %v444
    %v531 = vpack.c.b16 %v447, %v446
    %v532 = vpack.c.b16 %v449, %v448
    %v533 = vpack.c.b16 %v451, %v450
    %v534 = vpack.c.b16 %v453, %v452
    %v535 = vpack.c.b16 %v455, %v454
    %v536 = vpack.c.b16 %v457, %v456
    %v537 = vpack.c.b16 %v459, %v458
    %v538 = vpack.c.b16 %v461, %v460
    %v539 = vpack.c.b16 %v463, %v462
    %v540 = vpack.c.b16 %v465, %v464
    %v541 = vpack.c.b16 %v467, %v466
    %v542 = vpack.c.b16 %v469, %v468
    %v543 = vpack.c.b16 %v471, %v470
    %v544 = vpack.c.b16 %v473, %v472
    %v545 = vpack.c.b16 %v475, %v474
    %v546 = vpack.c.b16 %v477, %v476
    %v547 = vpack.c.b16 %v479, %v478
    %v548 = vpack.c.b16 %v481, %v480
    %v549 = vpack.c.b16 %v483, %v482
    %v550 = vpack.c.b16 %v485, %v484
    %v551 = vpack.c.b16 %v487, %v486
    %616 = vmatprep.subr.bf16.mxu0 0
    %617 = vmatpush1.bf16.msra.mxu0 %v495
    %618 = vmatprep.subr.bf16.mxu0 0
    %619 = vmatpush1.bf16.msra.mxu0 %v494
    %620 = vmatprep.subr.bf16.mxu0 0
    %621 = vmatpush1.bf16.msra.mxu0 %v493
    %622 = vmatprep.subr.bf16.mxu0 0
    %623 = vmatpush1.bf16.msra.mxu0 %v492
    %624 = vmatprep.subr.bf16.mxu0 0
    %625 = vmatpush1.bf16.msra.mxu0 %v491
    %626 = vmatprep.subr.bf16.mxu0 0
    %627 = vmatpush1.bf16.msra.mxu0 %v490
    %628 = vmatprep.subr.bf16.mxu0 0
    %629 = vmatpush1.bf16.msra.mxu0 %v489
    %630 = vmatprep.subr.bf16.mxu0 0
    %631 = vmatpush1.bf16.msra.mxu0 %v488
    %632 = vmatprep.subr.bf16.mxu0 0
    %633 = vmatpush2.bf16.msra.mxu0 %v503
    %634 = vmatprep.subr.bf16.mxu0 0
    %635 = vmatpush2.bf16.msra.mxu0 %v502
    %636 = vmatprep.subr.bf16.mxu0 0
    %637 = vmatpush2.bf16.msra.mxu0 %v501
    %638 = vmatprep.subr.bf16.mxu0 0
    %639 = vmatpush2.bf16.msra.mxu0 %v500
    %640 = vmatprep.subr.bf16.mxu0 0
    %641 = vmatpush2.bf16.msra.mxu0 %v499
    %642 = vmatprep.subr.bf16.mxu0 0
    %643 = vmatpush2.bf16.msra.mxu0 %v498
    %644 = vmatprep.subr.bf16.mxu0 0
    %645 = vmatpush2.bf16.msra.mxu0 %v497
    %646 = vmatprep.subr.bf16.mxu0 0
    %647 = vmatpush2.bf16.msra.mxu0 %v496
    %648 = vmatprep.mubr.bf16.mxu0 %v212
    %649 = vmatmul.mubr.bf16.gmra.mxu0 %v198
    %v650 = vpop.f32.mrf.mxu0
    %v651 = vadd.f32 0.0, %v650
    %v652 = vpop.f32.mrf.mxu0
    %v653 = vpop.f32.mrf.mxu0
    %v654 = vpop.f32.mrf.mxu0
    %655 = vdwg.mxu0
    %656 = vmatprep.subr.bf16.mxu0 0
    %657 = vmatpush1.bf16.msra.mxu0 %v511
    %658 = vmatprep.subr.bf16.mxu0 0
    %659 = vmatpush1.bf16.msra.mxu0 %v510
    %660 = vmatprep.subr.bf16.mxu0 0
    %661 = vmatpush1.bf16.msra.mxu0 %v509
    %662 = vmatprep.subr.bf16.mxu0 0
    %663 = vmatpush1.bf16.msra.mxu0 %v508
    %664 = vmatprep.subr.bf16.mxu0 0
    %665 = vmatpush1.bf16.msra.mxu0 %v507
    %666 = vmatprep.subr.bf16.mxu0 0
    %667 = vmatpush1.bf16.msra.mxu0 %v506
    %668 = vmatprep.subr.bf16.mxu0 0
    %669 = vmatpush1.bf16.msra.mxu0 %v505
    %670 = vmatprep.subr.bf16.mxu0 0
    %671 = vmatpush1.bf16.msra.mxu0 %v504
    %672 = vmatprep.subr.bf16.mxu0 0
    %673 = vmatpush2.bf16.msra.mxu0 %v519
    %674 = vmatprep.subr.bf16.mxu0 0
    %675 = vmatpush2.bf16.msra.mxu0 %v518
    %676 = vmatprep.subr.bf16.mxu0 0
    %677 = vmatpush2.bf16.msra.mxu0 %v517
    %678 = vmatprep.subr.bf16.mxu0 0
    %679 = vmatpush2.bf16.msra.mxu0 %v516
    %680 = vmatprep.subr.bf16.mxu0 0
    %681 = vmatpush2.bf16.msra.mxu0 %v515
    %682 = vmatprep.subr.bf16.mxu0 0
    %683 = vmatpush2.bf16.msra.mxu0 %v514
    %684 = vmatprep.subr.bf16.mxu0 0
    %685 = vmatpush2.bf16.msra.mxu0 %v513
    %686 = vmatprep.subr.bf16.mxu0 0
    %687 = vmatpush2.bf16.msra.mxu0 %v512
    %688 = vmatprep.mubr.bf16.mxu0 %v222
    %689 = vmatmul.mubr.bf16.gmra.mxu0 %v220
    %v690 = vpop.f32.mrf.mxu0
    %v691 = vadd.f32 %v651, %v690
    %v692 = vpop.f32.mrf.mxu0
    %v693 = vpop.f32.mrf.mxu0
    %v694 = vpop.f32.mrf.mxu0
    %695 = vdwg.mxu0
    %696 = vmatprep.subr.bf16.mxu0 0
    %697 = vmatpush1.bf16.msra.mxu0 %v527
    %698 = vmatprep.subr.bf16.mxu0 0
    %699 = vmatpush1.bf16.msra.mxu0 %v526
    %700 = vmatprep.subr.bf16.mxu0 0
    %701 = vmatpush1.bf16.msra.mxu0 %v525
    %702 = vmatprep.subr.bf16.mxu0 0
    %703 = vmatpush1.bf16.msra.mxu0 %v524
    %704 = vmatprep.subr.bf16.mxu0 0
    %705 = vmatpush1.bf16.msra.mxu0 %v523
    %706 = vmatprep.subr.bf16.mxu0 0
    %707 = vmatpush1.bf16.msra.mxu0 %v522
    %708 = vmatprep.subr.bf16.mxu0 0
    %709 = vmatpush1.bf16.msra.mxu0 %v521
    %710 = vmatprep.subr.bf16.mxu0 0
    %711 = vmatpush1.bf16.msra.mxu0 %v520
    %712 = vmatprep.subr.bf16.mxu0 0
    %713 = vmatpush2.bf16.msra.mxu0 %v535
    %714 = vmatprep.subr.bf16.mxu0 0
    %715 = vmatpush2.bf16.msra.mxu0 %v534
    %716 = vmatprep.subr.bf16.mxu0 0
    %717 = vmatpush2.bf16.msra.mxu0 %v533
    %718 = vmatprep.subr.bf16.mxu0 0
    %719 = vmatpush2.bf16.msra.mxu0 %v532
    %720 = vmatprep.subr.bf16.mxu0 0
    %721 = vmatpush2.bf16.msra.mxu0 %v531
    %722 = vmatprep.subr.bf16.mxu0 0
    %723 = vmatpush2.bf16.msra.mxu0 %v530
    %724 = vmatprep.subr.bf16.mxu0 0
    %725 = vmatpush2.bf16.msra.mxu0 %v529
    %726 = vmatprep.subr.bf16.mxu0 0
    %727 = vmatpush2.bf16.msra.mxu0 %v528
    %728 = vmatprep.mubr.bf16.mxu0 %v219
    %729 = vmatmul.mubr.bf16.gmra.mxu0 %v205
    %v730 = vpop.f32.mrf.mxu0
    %v731 = vadd.f32 %v691, %v730
    %v732 = vpop.f32.mrf.mxu0
    %v733 = vpop.f32.mrf.mxu0
    %v734 = vpop.f32.mrf.mxu0
    %735 = vdwg.mxu0
    %736 = vmatprep.subr.bf16.mxu0 0
    %737 = vmatpush1.bf16.msra.mxu0 %v543
    %738 = vmatprep.subr.bf16.mxu0 0
    %739 = vmatpush1.bf16.msra.mxu0 %v542
    %740 = vmatprep.subr.bf16.mxu0 0
    %741 = vmatpush1.bf16.msra.mxu0 %v541
    %742 = vmatprep.subr.bf16.mxu0 0
    %743 = vmatpush1.bf16.msra.mxu0 %v540
    %744 = vmatprep.subr.bf16.mxu0 0
    %745 = vmatpush1.bf16.msra.mxu0 %v539
    %746 = vmatprep.subr.bf16.mxu0 0
    %747 = vmatpush1.bf16.msra.mxu0 %v538
    %748 = vmatprep.subr.bf16.mxu0 0
    %749 = vmatpush1.bf16.msra.mxu0 %v537
    %750 = vmatprep.subr.bf16.mxu0 0
    %751 = vmatpush1.bf16.msra.mxu0 %v536
    %752 = vmatprep.subr.bf16.mxu0 0
    %753 = vmatpush2.bf16.msra.mxu0 %v551
    %754 = vmatprep.subr.bf16.mxu0 0
    %755 = vmatpush2.bf16.msra.mxu0 %v550
    %756 = vmatprep.subr.bf16.mxu0 0
    %757 = vmatpush2.bf16.msra.mxu0 %v549
    %758 = vmatprep.subr.bf16.mxu0 0
    %759 = vmatpush2.bf16.msra.mxu0 %v548
    %760 = vmatprep.subr.bf16.mxu0 0
    %761 = vmatpush2.bf16.msra.mxu0 %v547
    %762 = vmatprep.subr.bf16.mxu0 0
    %763 = vmatpush2.bf16.msra.mxu0 %v546
    %764 = vmatprep.subr.bf16.mxu0 0
    %765 = vmatpush2.bf16.msra.mxu0 %v545
    %766 = vmatprep.subr.bf16.mxu0 0
    %767 = vmatpush2.bf16.msra.mxu0 %v544
    %768 = vmatprep.mubr.bf16.mxu0 %v223
    %769 = vmatmul.mubr.bf16.gmra.mxu0 %v221
    %v770 = vpop.f32.mrf.mxu0
    %v771 = vadd.f32 %v731, %v770
    %v772 = vpop.f32.mrf.mxu0
    %v773 = vpop.f32.mrf.mxu0
    %v774 = vpop.f32.mrf.mxu0
    %775 = vdwg.mxu0
    %v776 = vadd.f32 %v44, %v771
    %777 = vst [vmem:[#allocation2] sm:$0x3] %v776
    // Predicated region
    $region22: #{bayeswrap_forward.1} parent=1 // pred_check
      %p778 = pneg %p32
    $region23: #{bayeswrap_forward.1} parent=1 // pred_check_branch
      %780 = sbr.rel (%p778) target = $region25
    $region24: #{bayeswrap_forward.1} parent=1 // pred_region
      %v781 = vld [vmem:[#allocation2] sm:$0x3]
      %v782 = vlaneseq
      %v783 = vand.u32 %v782, 127
      %vm784 = vcmp.ge.s32.totalorder %v783, 0
      %vm785 = vcmp.lt.s32.totalorder %v783, 10
      %vm786 = vmand %vm784, %vm785
      %v787 = vsel %vm786, %v781, -1e+30
      %vm788 = vcmask 1041408
      %v789 = vsel %vm788, %v787, -inf
      %790 = vmax.xlane.f32.xlu0 %v789
      %v791 = vpop.xlane.xlu0 %790
      %v792 = vsub.f32 %v781, %v791
      %v793 = vmul.f32 %v792, 1.442695
      %v794 = vpow.pop %v793
      %v795 = vsel %vm786, %v794, 0.0
      %v796 = vsel %vm788, %v795, 0.0
      %797 = vadd.xlane.f32.xlu0 %v796
      %v798 = vpop.xlane.xlu0 %797
      %v799 = vrcp.pop %v798
      %v800 = vmul.f32 %v795, %v799
      %v801 = vadd.f32 %v800, 0.0
      %v802 = vlog2.pop %v798
      %v803 = vmul.f32 %v802, 0.6931472
      %v804 = vmul.f32 %v800, %v792
      %v805 = vsel %vm788, %v804, 0.0
      %806 = vadd.xlane.f32.xlu0 %v805
      %v807 = vpop.xlane.xlu0 %806
      %v808 = vsub.f32 %v803, %v807
      %v809 = vadd.f32 %v808, 0.0
      %vm810 = vcmp.ge.s32.totalorder %v783, 10
      %vm811 = vcmp.lt.s32.totalorder %v783, 20
      %vm812 = vmand %vm810, %vm811
      %v813 = vsel %vm812, %v781, -1e+30
      %v814 = vsel %vm788, %v813, -inf
      %815 = vmax.xlane.f32.xlu0 %v814
      %v816 = vpop.xlane.xlu0 %815
      %v817 = vsub.f32 %v781, %v816
      %v818 = vmul.f32 %v817, 1.442695
      %v819 = vpow.pop %v818
      %v820 = vsel %vm812, %v819, 0.0
      %v821 = vsel %vm788, %v820, 0.0
      %822 = vadd.xlane.f32.xlu0 %v821
      %v823 = vpop.xlane.xlu0 %822
      %v824 = vrcp.pop %v823
      %v825 = vmul.f32 %v820, %v824
      %v826 = vadd.f32 %v801, %v825
      %v827 = vlog2.pop %v823
      %v828 = vmul.f32 %v827, 0.6931472
      %v829 = vmul.f32 %v825, %v817
      %v830 = vsel %vm788, %v829, 0.0
      %831 = vadd.xlane.f32.xlu0 %v830
      %v832 = vpop.xlane.xlu0 %831
      %v833 = vsub.f32 %v828, %v832
      %v834 = vadd.f32 %v809, %v833
      %vm835 = vcmp.ge.s32.totalorder %v783, 20
      %vm836 = vcmp.lt.s32.totalorder %v783, 30
      %vm837 = vmand %vm835, %vm836
      %v838 = vsel %vm837, %v781, -1e+30
      %v839 = vsel %vm788, %v838, -inf
      %840 = vmax.xlane.f32.xlu0 %v839
      %v841 = vpop.xlane.xlu0 %840
      %v842 = vsub.f32 %v781, %v841
      %v843 = vmul.f32 %v842, 1.442695
      %v844 = vpow.pop %v843
      %v845 = vsel %vm837, %v844, 0.0
      %v846 = vsel %vm788, %v845, 0.0
      %847 = vadd.xlane.f32.xlu0 %v846
      %v848 = vpop.xlane.xlu0 %847
      %v849 = vrcp.pop %v848
      %v850 = vmul.f32 %v845, %v849
      %v851 = vadd.f32 %v826, %v850
      %v852 = vlog2.pop %v848
      %v853 = vmul.f32 %v852, 0.6931472
      %v854 = vmul.f32 %v850, %v842
      %v855 = vsel %vm788, %v854, 0.0
      %856 = vadd.xlane.f32.xlu0 %v855
      %v857 = vpop.xlane.xlu0 %856
      %v858 = vsub.f32 %v853, %v857
      %v859 = vadd.f32 %v834, %v858
      %vm860 = vcmp.ge.s32.totalorder %v783, 30
      %vm861 = vcmp.lt.s32.totalorder %v783, 40
      %vm862 = vmand %vm860, %vm861
      %v863 = vsel %vm862, %v781, -1e+30
      %v864 = vsel %vm788, %v863, -inf
      %865 = vmax.xlane.f32.xlu0 %v864
      %v866 = vpop.xlane.xlu0 %865
      %v867 = vsub.f32 %v781, %v866
      %v868 = vmul.f32 %v867, 1.442695
      %v869 = vpow.pop %v868
      %v870 = vsel %vm862, %v869, 0.0
      %v871 = vsel %vm788, %v870, 0.0
      %872 = vadd.xlane.f32.xlu0 %v871
      %v873 = vpop.xlane.xlu0 %872
      %v874 = vrcp.pop %v873
      %v875 = vmul.f32 %v870, %v874
      %v876 = vadd.f32 %v851, %v875
      %v877 = vlog2.pop %v873
      %v878 = vmul.f32 %v877, 0.6931472
      %v879 = vmul.f32 %v875, %v867
      %v880 = vsel %vm788, %v879, 0.0
      %881 = vadd.xlane.f32.xlu0 %v880
      %v882 = vpop.xlane.xlu0 %881
      %v883 = vsub.f32 %v878, %v882
      %v884 = vadd.f32 %v859, %v883
      %v885 = vsel %vm861, %v781, 0.0
      %886 = vst [vmem:[%s3] sm:$0x3] %v885
      %887 = vst [vmem:[%s4] sm:$0x3] %v876
      %v888 = vmul.f32 %v884, 0.25
      %889 = vst [vmem:[%s5] sm:$0x3] %v888
    $region25: #{bayeswrap_forward.1} parent=1 // pred_fallthru
      _
    // Predicated region
    $region26: #{bayeswrap_forward.1} parent=1 // pred_check
      _
    $region27: #{bayeswrap_forward.1} parent=1 // pred_check_branch
      %891 = sbr.rel (0) target = $region29
    $region28: #{bayeswrap_forward.1} parent=1 // pred_region
      _
    $region29: #{bayeswrap_forward.1} parent=1 // pred_fallthru
      _
    // Predicated region
    $region30: #{bayeswrap_forward.1} parent=1 // pred_check
      _
    $region31: #{bayeswrap_forward.1} parent=1 // pred_check_branch
      %893 = sbr.rel (0) target = $region33
    $region32: #{bayeswrap_forward.1} parent=1 // pred_region
      _
    $region33: #{bayeswrap_forward.1} parent=1 // pred_fallthru
      _
    // Predicated region
    $region34: #{bayeswrap_forward.1} parent=1 // pred_check
      _
    $region35: #{bayeswrap_forward.1} parent=1 // pred_check_branch
      %895 = sbr.rel (0) target = $region37
    $region36: #{bayeswrap_forward.1} parent=1 // pred_region
      _
    $region37: #{bayeswrap_forward.1} parent=1 // pred_fallthru
      _
    // Predicated region
    $region38: #{bayeswrap_forward.1} parent=1 // pred_check
      _
    $region39: #{bayeswrap_forward.1} parent=1 // pred_check_branch
      %897 = sbr.rel (0) target = $region41
    $region40: #{bayeswrap_forward.1} parent=1 // pred_region
      _
    $region41: #{bayeswrap_forward.1} parent=1 // pred_fallthru
      _
    // Predicated region
    $region42: #{bayeswrap_forward.1} parent=1 // pred_check
      _
    $region43: #{bayeswrap_forward.1} parent=1 // pred_check_branch
      %899 = sbr.rel (0) target = $region45
    $region44: #{bayeswrap_forward.1} parent=1 // pred_region
      _
    $region45: #{bayeswrap_forward.1} parent=1 // pred_fallthru
      _
    // Predicated region
    $region46: #{bayeswrap_forward.1} parent=1 // pred_check
      _
    $region47: #{bayeswrap_forward.1} parent=1 // pred_check_branch
      %901 = sbr.rel (0) target = $region49
    $region48: #{bayeswrap_forward.1} parent=1 // pred_region
      _
    $region49: #{bayeswrap_forward.1} parent=1 // pred_fallthru
      _
    %902 = vsyncpa [#allocation4], 1

</llo_original>
